<compile_context>
chip_gen: v5e
topology: v5e:2x2
jax: 0.10.0
libtpu: 0.0.40
codegen_flags: <defaults>
</compile_context>

<pallas_src>
import functools

import jax
import jax.numpy as jnp
from jax.experimental import pallas as pl
from jax.experimental.pallas import tpu as pltpu


def _round_up(n, m):
    return ((n + m - 1) // m) * m


def _cdiv(a, b):
    return (a + b - 1) // b


@functools.lru_cache(maxsize=1)
def _vmem_cap_bytes():
    """Generation-aware VMEM cap, leaving headroom for compiler scratch."""
    try:
        physical = pltpu.get_tpu_info().vmem_capacity_bytes
    except Exception:
        physical = 128 * 1024 * 1024
    if physical <= 64 * 1024 * 1024:
        # v7x-class (64 MiB per TensorCore): never request the whole thing.
        return max(physical - 12 * 1024 * 1024, 32 * 1024 * 1024)
    # v5e / v6e: 128 MiB physical but tiny scoped defaults -> allow a high cap.
    return min(physical - 16 * 1024 * 1024, 112 * 1024 * 1024)


def _mlp_kernel(x_ref, w1_ref, b1_ref, w2_ref, b2_ref, w3_ref, b3_ref, o_ref):
    # fc1 + ReLU  (bf16 MXU operands, f32 accumulation).  Dropout is identity
    # at inference.
    h1 = jnp.dot(x_ref[...], w1_ref[...], preferred_element_type=jnp.float32)
    h1 = jnp.maximum(h1 + b1_ref[...], 0.0)
    # TODO(synk): training-mode dropout would go here via pltpu.prng_seed +
    # pltpu.prng_random_bits (inverted dropout) to keep the fusion intact.

    # fc2 + ReLU
    h2 = jnp.dot(h1.astype(jnp.bfloat16), w2_ref[...],
                 preferred_element_type=jnp.float32)
    h2 = jnp.maximum(h2 + b2_ref[...], 0.0)

    # fc3
    out = jnp.dot(h2.astype(jnp.bfloat16), w3_ref[...],
                  preferred_element_type=jnp.float32)
    o_ref[...] = (out + b3_ref[...]).astype(o_ref.dtype)


@functools.partial(jax.jit, static_argnames=("out_size", "block_b"))
def _mlp_pallas(x, w1_p, b1_p, w2_p, b2_p, w3_p, b3_p, *, out_size,
                block_b=256):
    """Fused MLP forward on pre-padded params.  x: (B, in_size) float32."""
    B, in_size = x.shape
    in_p, h1_p = w1_p.shape
    h2_p, out_p = w2_p.shape[1], w3_p.shape[1]

    # ---- batch tiling ----
    # * multiple of 16 sublanes (bf16 x packs 16 rows per vreg)
    # * aim for >=2 grid steps so both v7x TensorCores get work
    block_b = max(16, min(block_b, _round_up(_cdiv(B, 2), 16)))
    block_b = _round_up(block_b, 16)
    B_p = _round_up(B, block_b)
    grid = (B_p // block_b,)

    x_p = jnp.pad(x, ((0, B_p - B), (0, in_p - in_size))).astype(jnp.bfloat16)

    # ---- advisory cost estimate for XLA's scheduler ----
    flops = 2 * B_p * (in_p * h1_p + h1_p * h2_p + h2_p * out_p)
    bytes_accessed = (
        x_p.size * 2
        + (w1_p.size + w2_p.size + w3_p.size) * 2
        + (b1_p.size + b2_p.size + b3_p.size) * 4
        + B_p * out_p * 4)
    cost = pl.CostEstimate(flops=flops, transcendentals=0,
                           bytes_accessed=bytes_accessed)

    # ---- VMEM budget ----
    # Weights/biases are single-buffered (x1); x/out tiles are double-buffered
    # by the pipeline (x2); f32 h1/h2 intermediates live once.
    weight_bytes = ((w1_p.size + w2_p.size + w3_p.size) * 2
                    + (b1_p.size + b2_p.size + b3_p.size) * 4)
    act_bytes = 2 * block_b * (in_p * 2 + out_p * 4)
    inter_bytes = block_b * (h1_p + h2_p) * 4
    footprint = weight_bytes + act_bytes + inter_bytes
    vmem_limit = int(min(max(int(1.5 * footprint), 32 * 1024 * 1024),
                         _vmem_cap_bytes()))
    # NOTE: for very large hidden sizes (weights + intermediates > ~half the
    # cap, esp. on v7x) the hidden dims should additionally be N-/K-tiled with
    # an inner pltpu.emit_pipeline instead of keeping all weights resident.

    def resident(arr):
        # Constant index_map -> single-buffer to halve weight VMEM footprint.
        nd = arr.ndim
        return pl.BlockSpec(arr.shape, lambda i: (0,) * nd,
                            pipeline_mode=pl.Buffered(1))

    out_padded = pl.pallas_call(
        _mlp_kernel,
        out_shape=jax.ShapeDtypeStruct((B_p, out_p), jnp.float32),
        grid_spec=pltpu.PrefetchScalarGridSpec(
            num_scalar_prefetch=0,
            grid=grid,
            in_specs=[
                # batch-tiled activations
                pl.BlockSpec((block_b, in_p), lambda i: (i, 0)),
                # full weights / biases resident across the whole grid
                resident(w1_p), resident(b1_p),
                resident(w2_p), resident(b2_p),
                resident(w3_p), resident(b3_p),
            ],
            out_specs=pl.BlockSpec((block_b, out_p), lambda i: (i, 0)),
        ),
        compiler_params=pltpu.CompilerParams(
            dimension_semantics=("parallel",),
            vmem_limit_bytes=vmem_limit,
        ),
        cost_estimate=cost,
    )(x_p, w1_p, b1_p, w2_p, b2_p, w3_p, b3_p)

    # strip batch / lane padding
    return out_padded[:B, :out_size].astype(x.dtype)


@functools.partial(jax.jit, static_argnames=("out_size",))
def _mlp_xla(x, w1_p, b1_p, w2_p, b2_p, w3_p, b3_p, *, out_size):
    """Small-problem fallback: plain XLA with the same bf16/f32 numerics."""
    xb = jnp.pad(x, ((0, 0), (0, w1_p.shape[0] - x.shape[1]))).astype(jnp.bfloat16)
    h = jnp.maximum(jnp.dot(xb, w1_p, preferred_element_type=jnp.float32) + b1_p, 0.0)
    h = jnp.maximum(jnp.dot(h.astype(jnp.bfloat16), w2_p,
                            preferred_element_type=jnp.float32) + b2_p, 0.0)
    out = jnp.dot(h.astype(jnp.bfloat16), w3_p,
                  preferred_element_type=jnp.float32) + b3_p
    return out[:, :out_size].astype(x.dtype)


def prepare_params(w1, b1, w2, b2, w3, b3):
    """Lane-pad feature dims to 128 multiples and cast matmul operands to bf16
    ONCE; reuse the result across forward calls (avoids per-call pad/cast HBM
    traffic).  For real models on v6e/v7x, consider sizing feature dims to 256
    multiples to fill the 2x256^2 MXU; 128 already saturates v5e's MXU.

    Weights are (in_features, out_features); biases become (1, out_features).
    Returns (padded_param_tuple, (in_size, out_size)).
    """
    b1 = jnp.asarray(b1).reshape(1, -1)
    b2 = jnp.asarray(b2).reshape(1, -1)
    b3 = jnp.asarray(b3).reshape(1, -1)
    in_size, h1 = w1.shape
    h2, out_size = w2.shape[1], w3.shape[1]
    in_p, h1_p, h2_p, out_p = (_round_up(d, 128)
                               for d in (in_size, h1, h2, out_size))

    pad2 = lambda a, r, c: jnp.pad(a, ((0, r - a.shape[0]), (0, c - a.shape[1])))
    padded = (
        pad2(w1, in_p, h1_p).astype(jnp.bfloat16),
        pad2(b1, 1, h1_p).astype(jnp.float32),
        pad2(w2, h1_p, h2_p).astype(jnp.bfloat16),
        pad2(b2, 1, h2_p).astype(jnp.float32),
        pad2(w3, h2_p, out_p).astype(jnp.bfloat16),
        pad2(b3, 1, out_p).astype(jnp.float32),
    )
    return padded, (in_size, out_size)


def customed_mlp_forward(x, padded, sizes, *, block_b=256, force_pallas=False):
    """CustomedMLP.forward (eval mode).  `padded, sizes = prepare_params(...)`."""
    in_size, out_size = sizes
    B = x.shape[0]
    h_max = max(padded[0].shape[1], padded[2].shape[1])
    if not force_pallas and B * h_max < 16 * 1024:
        # Toy sizes: the kernel would be pure per-step/padding overhead.
        return _mlp_xla(x, *padded, out_size=out_size)
    return _mlp_pallas(x, *padded, out_size=out_size, block_b=block_b)


def init_params(key, input_size, hidden1, hidden2, output_size):
    """nn.Linear-style U(-1/sqrt(fan_in), 1/sqrt(fan_in)) init.

    Weights are (in_features, out_features) so the kernel computes x @ W.
    """
    keys = jax.random.split(key, 6)

    def lin(kw, kb, fan_in, fan_out):
        bound = 1.0 / jnp.sqrt(fan_in)
        w = jax.random.uniform(kw, (fan_in, fan_out), jnp.float32, -bound, bound)
        b = jax.random.uniform(kb, (1, fan_out), jnp.float32, -bound, bound)
        return w, b

    w1, b1 = lin(keys[0], keys[1], input_size, hidden1)
    w2, b2 = lin(keys[2], keys[3], hidden1, hidden2)
    w3, b3 = lin(keys[4], keys[5], hidden2, output_size)
    return w1, b1, w2, b2, w3, b3


def reference_forward(x, w1, b1, w2, b2, w3, b3):
    """Pure-f32 reference matching the PyTorch eval() forward."""
    h = jnp.maximum(x @ w1 + b1, 0.0)
    h = jnp.maximum(h @ w2 + b2, 0.0)
    return h @ w3 + b3


if __name__ == "__main__":
    # Small-but-non-trivial shapes consistent with the module's (B, input_size)
    # forward; input/hidden2/output exercise lane padding, batch=64 gives a
    # 2-step parallel grid (both v7x TensorCores busy).
    batch, input_size, hidden1, hidden2, output_size = 64, 96, 256, 192, 48
    dropout_rate = 0.5  # unused at inference (identity)

    key = jax.random.PRNGKey(0)
    kx, kp = jax.random.split(key)
    x = jax.random.normal(kx, (batch, input_size), dtype=jnp.float32)
    params = init_params(kp, input_size, hidden1, hidden2, output_size)

    padded, sizes = prepare_params(*params)  # pad + bf16-cast once, then reuse
    out = customed_mlp_forward(x, padded, sizes, force_pallas=True)
    out = jax.block_until_ready(out)

    ref = reference_forward(x, *params)
    assert out.shape == (batch, output_size)
    # bf16 matmul operands (f32 accumulation) vs f32 reference
    assert jnp.allclose(out, ref, atol=5e-2, rtol=5e-2)

    print("KERNEL_OK")
</pallas_src>

<mosaic_0001>
module attributes {stable_mosaic.version = 11 : i64} {
  func.func @_mlp_kernel(%arg0: i32, %arg1: memref<32x128xbf16, #tpu.memory_space<vmem>>, %arg2: memref<128x256xbf16, #tpu.memory_space<vmem>>, %arg3: memref<1x256xf32, #tpu.memory_space<vmem>>, %arg4: memref<256x256xbf16, #tpu.memory_space<vmem>>, %arg5: memref<1x256xf32, #tpu.memory_space<vmem>>, %arg6: memref<256x128xbf16, #tpu.memory_space<vmem>>, %arg7: memref<1x128xf32, #tpu.memory_space<vmem>>, %arg8: memref<32x128xf32, #tpu.memory_space<vmem>>) attributes {dimension_semantics = [#tpu.dimension_semantics<parallel>], iteration_bounds = array<i64: 2>, scalar_prefetch = 0 : i64, scratch_operands = 0 : i64, tpu.core_type = #tpu.core_type<tc>, window_params = [{transform_indices = @transform_0, window_bounds = array<i64: 32, 128>}, {pipeline_mode = #tpu.pipeline_mode<synchronous>, transform_indices = @transform_1, window_bounds = array<i64: 128, 256>}, {pipeline_mode = #tpu.pipeline_mode<synchronous>, transform_indices = @transform_2, window_bounds = array<i64: 1, 256>}, {pipeline_mode = #tpu.pipeline_mode<synchronous>, transform_indices = @transform_3, window_bounds = array<i64: 256, 256>}, {pipeline_mode = #tpu.pipeline_mode<synchronous>, transform_indices = @transform_4, window_bounds = array<i64: 1, 256>}, {pipeline_mode = #tpu.pipeline_mode<synchronous>, transform_indices = @transform_5, window_bounds = array<i64: 256, 128>}, {pipeline_mode = #tpu.pipeline_mode<synchronous>, transform_indices = @transform_6, window_bounds = array<i64: 1, 128>}, {transform_indices = @transform_7, window_bounds = array<i64: 32, 128>}]} {
    %c0 = arith.constant 0 : index
    %c0_0 = arith.constant 0 : index
    %0 = vector.load %arg1[%c0, %c0_0] : memref<32x128xbf16, #tpu.memory_space<vmem>>, vector<32x128xbf16>
    %c0_1 = arith.constant 0 : index
    %c0_2 = arith.constant 0 : index
    %1 = vector.load %arg2[%c0_1, %c0_2] : memref<128x256xbf16, #tpu.memory_space<vmem>>, vector<128x256xbf16>
    %cst = arith.constant dense<0.000000e+00> : vector<32x256xf32>
    %2 = tpu.matmul %0, %1, %cst {dimension_numbers = #tpu.dot_dimension_numbers<[1], [0], [0], [1], [0, 0, 1, 1], [], []>} : vector<32x128xbf16>, vector<128x256xbf16>, vector<32x256xf32> -> vector<32x256xf32>
    %c0_3 = arith.constant 0 : index
    %c0_4 = arith.constant 0 : index
    %3 = vector.load %arg3[%c0_3, %c0_4] : memref<1x256xf32, #tpu.memory_space<vmem>>, vector<1x256xf32>
    %4 = vector.broadcast %3 : vector<1x256xf32> to vector<32x256xf32>
    %5 = arith.addf %2, %4 : vector<32x256xf32>
    %cst_5 = arith.constant 0.000000e+00 : f32
    %6 = vector.broadcast %cst_5 : f32 to vector<32x256xf32>
    %7 = arith.maximumf %5, %6 : vector<32x256xf32>
    %8 = arith.truncf %7 : vector<32x256xf32> to vector<32x256xbf16>
    %c0_6 = arith.constant 0 : index
    %c0_7 = arith.constant 0 : index
    %9 = vector.load %arg4[%c0_6, %c0_7] : memref<256x256xbf16, #tpu.memory_space<vmem>>, vector<256x256xbf16>
    %cst_8 = arith.constant dense<0.000000e+00> : vector<32x256xf32>
    %10 = tpu.matmul %8, %9, %cst_8 {dimension_numbers = #tpu.dot_dimension_numbers<[1], [0], [0], [1], [0, 0, 1, 1], [], []>} : vector<32x256xbf16>, vector<256x256xbf16>, vector<32x256xf32> -> vector<32x256xf32>
    %c0_9 = arith.constant 0 : index
    %c0_10 = arith.constant 0 : index
    %11 = vector.load %arg5[%c0_9, %c0_10] : memref<1x256xf32, #tpu.memory_space<vmem>>, vector<1x256xf32>
    %12 = vector.broadcast %11 : vector<1x256xf32> to vector<32x256xf32>
    %13 = arith.addf %10, %12 : vector<32x256xf32>
    %cst_11 = arith.constant 0.000000e+00 : f32
    %14 = vector.broadcast %cst_11 : f32 to vector<32x256xf32>
    %15 = arith.maximumf %13, %14 : vector<32x256xf32>
    %16 = arith.truncf %15 : vector<32x256xf32> to vector<32x256xbf16>
    %c0_12 = arith.constant 0 : index
    %c0_13 = arith.constant 0 : index
    %17 = vector.load %arg6[%c0_12, %c0_13] : memref<256x128xbf16, #tpu.memory_space<vmem>>, vector<256x128xbf16>
    %cst_14 = arith.constant dense<0.000000e+00> : vector<32x128xf32>
    %18 = tpu.matmul %16, %17, %cst_14 {dimension_numbers = #tpu.dot_dimension_numbers<[1], [0], [0], [1], [0, 0, 1, 1], [], []>} : vector<32x256xbf16>, vector<256x128xbf16>, vector<32x128xf32> -> vector<32x128xf32>
    %c0_15 = arith.constant 0 : index
    %c0_16 = arith.constant 0 : index
    %19 = vector.load %arg7[%c0_15, %c0_16] : memref<1x128xf32, #tpu.memory_space<vmem>>, vector<1x128xf32>
    %20 = vector.broadcast %19 : vector<1x128xf32> to vector<32x128xf32>
    %21 = arith.addf %18, %20 : vector<32x128xf32>
    %c0_17 = arith.constant 0 : index
    %c0_18 = arith.constant 0 : index
    %22 = vector.load %arg8[%c0_17, %c0_18] : memref<32x128xf32, #tpu.memory_space<vmem>>, vector<32x128xf32>
    tpu.vector_store %arg8[%c0_17, %c0_18], %21 {strides = array<i32>} : memref<32x128xf32, #tpu.memory_space<vmem>>, vector<32x128xf32>,
    return
  }
  func.func @transform_0(%arg0: i32) -> (i32, i32) {
    %c0_i32 = arith.constant 0 : i32
    %c0_i32_0 = arith.constant 0 : i32
    return %arg0, %c0_i32 : i32, i32
  }
  func.func @transform_1(%arg0: i32) -> (i32, i32) {
    %c0_i32 = arith.constant 0 : i32
    %c0_i32_0 = arith.constant 0 : i32
    %c0_i32_1 = arith.constant 0 : i32
    return %c0_i32, %c0_i32_0 : i32, i32
  }
  func.func @transform_2(%arg0: i32) -> (i32, i32) {
    %c0_i32 = arith.constant 0 : i32
    %c0_i32_0 = arith.constant 0 : i32
    %c0_i32_1 = arith.constant 0 : i32
    return %c0_i32, %c0_i32_0 : i32, i32
  }
  func.func @transform_3(%arg0: i32) -> (i32, i32) {
    %c0_i32 = arith.constant 0 : i32
    %c0_i32_0 = arith.constant 0 : i32
    %c0_i32_1 = arith.constant 0 : i32
    return %c0_i32, %c0_i32_0 : i32, i32
  }
  func.func @transform_4(%arg0: i32) -> (i32, i32) {
    %c0_i32 = arith.constant 0 : i32
    %c0_i32_0 = arith.constant 0 : i32
    %c0_i32_1 = arith.constant 0 : i32
    return %c0_i32, %c0_i32_0 : i32, i32
  }
  func.func @transform_5(%arg0: i32) -> (i32, i32) {
    %c0_i32 = arith.constant 0 : i32
    %c0_i32_0 = arith.constant 0 : i32
    %c0_i32_1 = arith.constant 0 : i32
    return %c0_i32, %c0_i32_0 : i32, i32
  }
  func.func @transform_6(%arg0: i32) -> (i32, i32) {
    %c0_i32 = arith.constant 0 : i32
    %c0_i32_0 = arith.constant 0 : i32
    %c0_i32_1 = arith.constant 0 : i32
    return %c0_i32, %c0_i32_0 : i32, i32
  }
  func.func @transform_7(%arg0: i32) -> (i32, i32) {
    %c0_i32 = arith.constant 0 : i32
    %c0_i32_0 = arith.constant 0 : i32
    return %arg0, %c0_i32 : i32, i32
  }
}

</mosaic_0001>

<llo_original>
// kernel: _mlp_pallas.1
$region0: #{_mlp_pallas.1}
  #allocation0 [shape = 'u32[]', space=smem, size = 0x4, offset = 0x4, fixed_abs, tag = 'smem constant byte address 0x4 - core index']
  #allocation1 [shape = 'u32[72,128]{1,0:T(1,128)}', space=vmem, size = 0x9000, scoped, tag = 'internal scratch']
  %s0 = inlined_call_operand.vmem [shape: bf16[64,128], index: 0, kind: input, shape index: {}]
  %s1 = inlined_call_operand.vmem [shape: bf16[128,256], index: 1, kind: input, shape index: {}]
  %s2 = inlined_call_operand.vmem [shape: f32[1,256], index: 2, kind: input, shape index: {}]
  %s3 = inlined_call_operand.hbm [shape: bf16[256,256], index: 3, kind: input, shape index: {}]
  %s4 = inlined_call_operand.vmem [shape: f32[1,256], index: 4, kind: input, shape index: {}]
  %s5 = inlined_call_operand.hbm [shape: bf16[256,128], index: 5, kind: input, shape index: {}]
  %s6 = inlined_call_operand.vmem [shape: f32[1,128], index: 6, kind: input, shape index: {}]
  %s7 = inlined_call_operand.vmem [shape: f32[64,128], index: 7, kind: output, shape index: {}]
  %s8 = sld [smem:[#allocation0]]
  $region69: #{_mlp_pallas.1} parent=0
    _
  %s10 = ssub.s32 1, %s8
  %s11 = scalar_select 0, %s10, %s8
  $region1: #{_mlp_pallas.1} parent=0
    #allocation2 [shape = 'u8[131072]{0}', space=vmem, size = 0x20000, scoped, tag = 'input window, operand 3, single buffered']
    #allocation3 [shape = 's32[2]{0}', space=sflag, size = 0x8, scoped, tag = 'scoped memory for _mlp_pallas.1']
    #allocation4 [shape = 'u8[65536]{0}', space=vmem, size = 0x10000, scoped, tag = 'input window, operand 5, single buffered']
    #allocation5 [shape = 's32[1]{0}', space=sflag, size = 0x4, scoped, tag = 'scoped memory for _mlp_pallas.1']
    %12 = vsyncpa [#allocation3], 0
    %13 = vsyncpa [#allocation5], 0
    loop: start=0, step=1, limit=4
    $region2: #{_mlp_pallas.1} parent=1 // loop_pre_header
      _
    $region3: #{_mlp_pallas.1} parent=1 // loop_header
      %s15 = sphi 0, %s19
      %p16 = scmp.ge.s32.totalorder %s15, 4
      %s25 = sphi 0, %s27
      %s28 = sphi 0, %s25
      %s29 = sphi 0, %s28
      %s45 = sphi 0, %s29
      %s49 = sphi 0, %s49
      %s51 = sphi 0, %s49
      %s52 = sphi 0, %s51
      %s66 = sphi 0, %s52
      %s70 = sphi 0, %s70
      %s72 = sphi 0, %s70
      %s73 = sphi 0, %s72
      %s87 = sphi 0, %s73
      %s91 = sphi 0, %s91
      %s93 = sphi 0, %s91
      %s94 = sphi 0, %s93
      %s108 = sphi 0, %s94
      %s112 = sphi 0, %s112
      %s114 = sphi 0, %s112
      %s115 = sphi 0, %s114
      %s129 = sphi 0, %s115
      %s133 = sphi 0, %s133
      %s135 = sphi 0, %s133
      %s136 = sphi 0, %s135
      %s150 = sphi 0, %s136
      %s154 = sphi 0, %s154
      %s156 = sphi 0, %s154
      %s157 = sphi 0, %s156
      %s171 = sphi 0, %s157
      %s177 = sphi 0, %s179
      %s180 = sphi 0, %s177
      %s181 = sphi 0, %s180
      %s197 = sphi 0, %s181
    $region4: #{_mlp_pallas.1} parent=1 // loop_header_branch
      %18 = sbr.rel (%p16) target = $region8
    $region5: #{_mlp_pallas.1} parent=1 // loop_body
      %s20 = ssub.s32 %s15, 1
      %s21 = ssub.s32 %s15, 2
      %s22 = sadd.s32 %s15, 1
      %s23 = ssub.s32 %s15, %s22
      %p24 = scmp.eq.s32.totalorder %s23, 0
      %s26 = sadd.s32 %s25, 1
      %s27 = scalar_select %p24, %s25, %s26
      %p30 = pneg %p24
      %p31 = scmp.eq.s32.totalorder %s15, 1
      %p32 = por %p30, %p31
      %p33 = scmp.ne.s32.totalorder %s25, %s28
      %p34 = scmp.eq.s32.totalorder %s15, 0
      %p35 = por %p33, %p34
      %p36 = scmp.ne.s32.totalorder %s25, %s28
      %p37 = scmp.eq.s32.totalorder %s20, 1
      %p38 = por %p36, %p37
      %p39 = scmp.ne.s32.totalorder %s28, %s29
      %p40 = scmp.eq.s32.totalorder %s20, 0
      %p41 = por %p39, %p40
      %p42 = scmp.ne.s32.totalorder %s28, %s29
      %p43 = scmp.eq.s32.totalorder %s21, 1
      %p44 = por %p42, %p43
      %p46 = scmp.ne.s32.totalorder %s29, %s45
      %p47 = scmp.eq.s32.totalorder %s21, 0
      %p48 = por %p46, %p47
      %s50 = sadd.s32 %s49, 1
      %p53 = scmp.eq.s32.totalorder %s15, 1
      %p54 = scmp.ne.s32.totalorder %s49, %s51
      %p55 = scmp.eq.s32.totalorder %s15, 0
      %p56 = por %p54, %p55
      %p57 = scmp.ne.s32.totalorder %s49, %s51
      %p58 = scmp.eq.s32.totalorder %s20, 1
      %p59 = por %p57, %p58
      %p60 = scmp.ne.s32.totalorder %s51, %s52
      %p61 = scmp.eq.s32.totalorder %s20, 0
      %p62 = por %p60, %p61
      %p63 = scmp.ne.s32.totalorder %s51, %s52
      %p64 = scmp.eq.s32.totalorder %s21, 1
      %p65 = por %p63, %p64
      %p67 = scmp.ne.s32.totalorder %s52, %s66
      %p68 = scmp.eq.s32.totalorder %s21, 0
      %p69 = por %p67, %p68
      %s71 = sadd.s32 %s70, 1
      %p74 = scmp.eq.s32.totalorder %s15, 1
      %p75 = scmp.ne.s32.totalorder %s70, %s72
      %p76 = scmp.eq.s32.totalorder %s15, 0
      %p77 = por %p75, %p76
      %p78 = scmp.ne.s32.totalorder %s70, %s72
      %p79 = scmp.eq.s32.totalorder %s20, 1
      %p80 = por %p78, %p79
      %p81 = scmp.ne.s32.totalorder %s72, %s73
      %p82 = scmp.eq.s32.totalorder %s20, 0
      %p83 = por %p81, %p82
      %p84 = scmp.ne.s32.totalorder %s72, %s73
      %p85 = scmp.eq.s32.totalorder %s21, 1
      %p86 = por %p84, %p85
      %p88 = scmp.ne.s32.totalorder %s73, %s87
      %p89 = scmp.eq.s32.totalorder %s21, 0
      %p90 = por %p88, %p89
      %s92 = sadd.s32 %s91, 1
      %p95 = scmp.eq.s32.totalorder %s15, 1
      %p96 = scmp.ne.s32.totalorder %s91, %s93
      %p97 = scmp.eq.s32.totalorder %s15, 0
      %p98 = por %p96, %p97
      %p99 = scmp.ne.s32.totalorder %s91, %s93
      %p100 = scmp.eq.s32.totalorder %s20, 1
      %p101 = por %p99, %p100
      %p102 = scmp.ne.s32.totalorder %s93, %s94
      %p103 = scmp.eq.s32.totalorder %s20, 0
      %p104 = por %p102, %p103
      %p105 = scmp.ne.s32.totalorder %s93, %s94
      %p106 = scmp.eq.s32.totalorder %s21, 1
      %p107 = por %p105, %p106
      %p109 = scmp.ne.s32.totalorder %s94, %s108
      %p110 = scmp.eq.s32.totalorder %s21, 0
      %p111 = por %p109, %p110
      %s113 = sadd.s32 %s112, 1
      %p116 = scmp.eq.s32.totalorder %s15, 1
      %p117 = scmp.ne.s32.totalorder %s112, %s114
      %p118 = scmp.eq.s32.totalorder %s15, 0
      %p119 = por %p117, %p118
      %p120 = scmp.ne.s32.totalorder %s112, %s114
      %p121 = scmp.eq.s32.totalorder %s20, 1
      %p122 = por %p120, %p121
      %p123 = scmp.ne.s32.totalorder %s114, %s115
      %p124 = scmp.eq.s32.totalorder %s20, 0
      %p125 = por %p123, %p124
      %p126 = scmp.ne.s32.totalorder %s114, %s115
      %p127 = scmp.eq.s32.totalorder %s21, 1
      %p128 = por %p126, %p127
      %p130 = scmp.ne.s32.totalorder %s115, %s129
      %p131 = scmp.eq.s32.totalorder %s21, 0
      %p132 = por %p130, %p131
      %s134 = sadd.s32 %s133, 1
      %p137 = scmp.eq.s32.totalorder %s15, 1
      %p138 = scmp.ne.s32.totalorder %s133, %s135
      %p139 = scmp.eq.s32.totalorder %s15, 0
      %p140 = por %p138, %p139
      %p141 = scmp.ne.s32.totalorder %s133, %s135
      %p142 = scmp.eq.s32.totalorder %s20, 1
      %p143 = por %p141, %p142
      %p144 = scmp.ne.s32.totalorder %s135, %s136
      %p145 = scmp.eq.s32.totalorder %s20, 0
      %p146 = por %p144, %p145
      %p147 = scmp.ne.s32.totalorder %s135, %s136
      %p148 = scmp.eq.s32.totalorder %s21, 1
      %p149 = por %p147, %p148
      %p151 = scmp.ne.s32.totalorder %s136, %s150
      %p152 = scmp.eq.s32.totalorder %s21, 0
      %p153 = por %p151, %p152
      %s155 = sadd.s32 %s154, 1
      %p158 = scmp.eq.s32.totalorder %s15, 1
      %p159 = scmp.ne.s32.totalorder %s154, %s156
      %p160 = scmp.eq.s32.totalorder %s15, 0
      %p161 = por %p159, %p160
      %p162 = scmp.ne.s32.totalorder %s154, %s156
      %p163 = scmp.eq.s32.totalorder %s20, 1
      %p164 = por %p162, %p163
      %p165 = scmp.ne.s32.totalorder %s156, %s157
      %p166 = scmp.eq.s32.totalorder %s20, 0
      %p167 = por %p165, %p166
      %p168 = scmp.ne.s32.totalorder %s156, %s157
      %p169 = scmp.eq.s32.totalorder %s21, 1
      %p170 = por %p168, %p169
      %p172 = scmp.ne.s32.totalorder %s157, %s171
      %p173 = scmp.eq.s32.totalorder %s21, 0
      %p174 = por %p172, %p173
      %s175 = ssub.s32 %s15, %s22
      %p176 = scmp.eq.s32.totalorder %s175, 0
      %s178 = sadd.s32 %s177, 1
      %s179 = scalar_select %p176, %s177, %s178
      %p182 = pneg %p176
      %p183 = scmp.eq.s32.totalorder %s15, 1
      %p184 = por %p182, %p183
      %p185 = scmp.ne.s32.totalorder %s177, %s180
      %p186 = scmp.eq.s32.totalorder %s15, 0
      %p187 = por %p185, %p186
      %p188 = scmp.ne.s32.totalorder %s177, %s180
      %p189 = scmp.eq.s32.totalorder %s20, 1
      %p190 = por %p188, %p189
      %p191 = scmp.ne.s32.totalorder %s180, %s181
      %p192 = scmp.eq.s32.totalorder %s20, 0
      %p193 = por %p191, %p192
      %p194 = scmp.ne.s32.totalorder %s180, %s181
      %p195 = scmp.eq.s32.totalorder %s21, 1
      %p196 = por %p194, %p195
      %p198 = scmp.ne.s32.totalorder %s181, %s197
      %p199 = scmp.eq.s32.totalorder %s21, 0
      %p200 = por %p198, %p199
      %p201 = scmp.le.s32.totalorder 1, %s15
      %p202 = scmp.lt.s32.totalorder %s15, 3
      %p203 = pnand %p201, %p202
      %p204 = pneg %p203
      // Predicated region
      $region9: #{_mlp_pallas.1} parent=5 // pred_check
        _
      $region10: #{_mlp_pallas.1} parent=5 // pred_check_branch
        %206 = sbr.rel (%p203) target = $region12
      $region11: #{_mlp_pallas.1} parent=5 // pred_region
        %s207 = ssub.s32 %s15, 1
        // Predicated region
        $region13: #{_mlp_pallas.1} parent=11 // pred_check
          %p208 = pneg %p62
        $region14: #{_mlp_pallas.1} parent=11 // pred_check_branch
          %210 = sbr.rel (%p208) target = $region16
        $region15: #{_mlp_pallas.1} parent=11 // pred_region
          _
        $region16: #{_mlp_pallas.1} parent=11 // pred_fallthru
          _
        // Predicated region
        $region17: #{_mlp_pallas.1} parent=11 // pred_check
          %p211 = pneg %p83
        $region18: #{_mlp_pallas.1} parent=11 // pred_check_branch
          %213 = sbr.rel (%p211) target = $region20
        $region19: #{_mlp_pallas.1} parent=11 // pred_region
          _
        $region20: #{_mlp_pallas.1} parent=11 // pred_fallthru
          _
        // Predicated region
        $region21: #{_mlp_pallas.1} parent=11 // pred_check
          %p214 = pneg %p104
        $region22: #{_mlp_pallas.1} parent=11 // pred_check_branch
          %216 = sbr.rel (%p214) target = $region24
        $region23: #{_mlp_pallas.1} parent=11 // pred_region
          %218 = vsyncadd [#allocation3], 0
          %s219 = sshll.u32 %s3, 4
          %s220 = int_to_ptr.hbm [resolvable:$true] %s219
          %s221 = sshll.u32 [#allocation2], 4
          %s222 = int_to_ptr.vmem [resolvable:$true] %s221
          %227 = dma.hbm_to_vmem [thread:$0]  %s220, 4096, %s222, [#allocation3], 128, 128, 8
        $region24: #{_mlp_pallas.1} parent=11 // pred_fallthru
          _
        // Predicated region
        $region25: #{_mlp_pallas.1} parent=11 // pred_check
          %p228 = pneg %p125
        $region26: #{_mlp_pallas.1} parent=11 // pred_check_branch
          %230 = sbr.rel (%p228) target = $region28
        $region27: #{_mlp_pallas.1} parent=11 // pred_region
          _
        $region28: #{_mlp_pallas.1} parent=11 // pred_fallthru
          _
        // Predicated region
        $region29: #{_mlp_pallas.1} parent=11 // pred_check
          %p231 = pneg %p146
        $region30: #{_mlp_pallas.1} parent=11 // pred_check_branch
          %233 = sbr.rel (%p231) target = $region32
        $region31: #{_mlp_pallas.1} parent=11 // pred_region
          %235 = vsyncadd [#allocation5], 0
          %s236 = sshll.u32 %s5, 4
          %s237 = int_to_ptr.hbm [resolvable:$true] %s236
          %s238 = sshll.u32 [#allocation4], 4
          %s239 = int_to_ptr.vmem [resolvable:$true] %s238
          %244 = dma.hbm_to_vmem [thread:$0]  %s237, 2048, %s239, [#allocation5], 64, 64, 4
        $region32: #{_mlp_pallas.1} parent=11 // pred_fallthru
          _
        // Predicated region
        $region33: #{_mlp_pallas.1} parent=11 // pred_check
          %p245 = pneg %p167
        $region34: #{_mlp_pallas.1} parent=11 // pred_check_branch
          %247 = sbr.rel (%p245) target = $region36
        $region35: #{_mlp_pallas.1} parent=11 // pred_region
          _
        $region36: #{_mlp_pallas.1} parent=11 // pred_fallthru
          _
      $region12: #{_mlp_pallas.1} parent=5 // pred_fallthru
        _
      %p248 = scmp.lt.s32.totalorder %s15, 2
      // Predicated region
      $region37: #{_mlp_pallas.1} parent=5 // pred_check
        %p249 = pneg %p248
      $region38: #{_mlp_pallas.1} parent=5 // pred_check_branch
        %251 = sbr.rel (%p249) target = $region40
      $region39: #{_mlp_pallas.1} parent=5 // pred_region
        // Predicated region
        $region41: #{_mlp_pallas.1} parent=39 // pred_check
          %p252 = pneg %p35
        $region42: #{_mlp_pallas.1} parent=39 // pred_check_branch
          %254 = sbr.rel (%p252) target = $region44
        $region43: #{_mlp_pallas.1} parent=39 // pred_region
          %s255 = smul.u32 4, %s15
          %p256 = scmp.lt.s32.totalorder %s255, 7
          %s257 = scalar_select %p256, %s255, 7
          %s258 = smul.addr %s257, 4
          %s259 = scalar_lea.vmem %s0, %s258
          %s260 = smul.u32 4, %s15
        $region44: #{_mlp_pallas.1} parent=39 // pred_fallthru
          _
      $region40: #{_mlp_pallas.1} parent=5 // pred_fallthru
        _
      %p261 = scmp.le.s32.totalorder 1, %s15
      %p262 = scmp.lt.s32.totalorder %s15, 3
      %p263 = pnand %p261, %p262
      %p264 = pneg %p263
      // Predicated region
      $region45: #{_mlp_pallas.1} parent=5 // pred_check
        _
      $region46: #{_mlp_pallas.1} parent=5 // pred_check_branch
        %266 = sbr.rel (%p263) target = $region48
      $region47: #{_mlp_pallas.1} parent=5 // pred_region
        %s267 = ssub.s32 %s15, 1
        // Predicated region
        $region49: #{_mlp_pallas.1} parent=47 // pred_check
          %p268 = pneg %p104
        $region50: #{_mlp_pallas.1} parent=47 // pred_check_branch
          %270 = sbr.rel (%p268) target = $region52
        $region51: #{_mlp_pallas.1} parent=47 // pred_region
          %272 = dma.done [#allocation3], 4096
        $region52: #{_mlp_pallas.1} parent=47 // pred_fallthru
          _
        // Predicated region
        $region53: #{_mlp_pallas.1} parent=47 // pred_check
          %p273 = pneg %p146
        $region54: #{_mlp_pallas.1} parent=47 // pred_check_branch
          %275 = sbr.rel (%p273) target = $region56
        $region55: #{_mlp_pallas.1} parent=47 // pred_region
          %277 = dma.done [#allocation5], 2048
        $region56: #{_mlp_pallas.1} parent=47 // pred_fallthru
          _
        %s278 = smul.u32 4, %s20
        %p279 = scmp.lt.s32.totalorder %s278, 7
        %s280 = scalar_select %p279, %s278, 7
        %s281 = smul.addr %s280, 4
        %s282 = scalar_lea.vmem %s0, %s281
        %p283 = pneg %p41
        %p284 = pneg %p38
        %p285 = pneg %p62
        %p286 = pneg %p59
        %p287 = pneg %p83
        %p288 = pneg %p80
        %p289 = pneg %p104
        %p290 = pneg %p101
        %p291 = pneg %p125
        %p292 = pneg %p122
        %p293 = pneg %p146
        %p294 = pneg %p143
        %p295 = pneg %p167
        %p296 = pneg %p164
        %p297 = pneg %p193
        %p298 = pneg %p190
        %s299 = smul.u32 4, %s20
        %p300 = scmp.lt.s32.totalorder %s299, 7
        %s301 = scalar_select %p300, %s299, 7
        %s302 = smul.addr %s301, 8
        %s303 = scalar_lea.vmem %s7, %s302
        %s304 = smul.u32 4, %s20
        %p305 = scmp.lt.s32.totalorder %s304, 7
        %s306 = scalar_select %p305, %s304, 7
        %s307 = smul.addr %s306, 4
        %s308 = scalar_lea.vmem %s0, %s307
        %s309 = smul.u32 4, %s20
        %s310 = smul.u32 4, %s20
        %p311 = scmp.lt.s32.totalorder %s310, 7
        %s312 = scalar_select %p311, %s310, 7
        %s313 = smul.addr %s312, 8
        %s314 = scalar_lea.vmem %s7, %s313
        %s315 = smul.u32 4, %s20
        %v316 = vld [vmem:[%s308] sm:$0xf]
        %v317 = vld [vmem:[%s308 + $0x4] sm:$0xf]
        %v318 = vld [vmem:[%s308 + $0x8] sm:$0xf]
        %v319 = vld [vmem:[%s308 + $0xc] sm:$0xf]
        %v320 = vld [vmem:[%s1] sm:$0xff]
        %v321 = vld [vmem:[%s1 + $0x8] sm:$0xff]
        %v322 = vld [vmem:[%s1 + $0x10] sm:$0xff]
        %v323 = vld [vmem:[%s1 + $0x18] sm:$0xff]
        %v324 = vld [vmem:[%s1 + $0x20] sm:$0xff]
        %v325 = vld [vmem:[%s1 + $0x28] sm:$0xff]
        %v326 = vld [vmem:[%s1 + $0x30] sm:$0xff]
        %v327 = vld [vmem:[%s1 + $0x38] sm:$0xff]
        %v328 = vld [vmem:[%s1 + $0x40] sm:$0xff]
        %v329 = vld [vmem:[%s1 + $0x48] sm:$0xff]
        %v330 = vld [vmem:[%s1 + $0x50] sm:$0xff]
        %v331 = vld [vmem:[%s1 + $0x58] sm:$0xff]
        %v332 = vld [vmem:[%s1 + $0x60] sm:$0xff]
        %v333 = vld [vmem:[%s1 + $0x68] sm:$0xff]
        %v334 = vld [vmem:[%s1 + $0x70] sm:$0xff]
        %v335 = vld [vmem:[%s1 + $0x78] sm:$0xff]
        %v336 = vld [vmem:[%s2] sm:$0x3]
        %v338 = vperm.slane %v336, 0
        %v339 = vperm.slane %v336, 1
        %v346 = vunpack.c.l.b16 %v316
        %v347 = vunpack.c.l.b16 %v317
        %v348 = vunpack.c.l.b16 %v318
        %v349 = vunpack.c.l.b16 %v319
        %v350 = vpack.c.b16 %v347, %v346
        %v351 = vpack.c.b16 %v349, %v348
        %v370 = vunpack.c.l.b16 %v320
        %v371 = vunpack.c.h.b16 %v320
        %v372 = vunpack.c.l.b16 %v321
        %v373 = vunpack.c.h.b16 %v321
        %v374 = vunpack.c.l.b16 %v322
        %v375 = vunpack.c.h.b16 %v322
        %v376 = vunpack.c.l.b16 %v323
        %v377 = vunpack.c.h.b16 %v323
        %v378 = vunpack.c.l.b16 %v324
        %v379 = vunpack.c.h.b16 %v324
        %v380 = vunpack.c.l.b16 %v325
        %v381 = vunpack.c.h.b16 %v325
        %v382 = vunpack.c.l.b16 %v326
        %v383 = vunpack.c.h.b16 %v326
        %v384 = vunpack.c.l.b16 %v327
        %v385 = vunpack.c.h.b16 %v327
        %v386 = vunpack.c.l.b16 %v328
        %v387 = vunpack.c.h.b16 %v328
        %v388 = vunpack.c.l.b16 %v329
        %v389 = vunpack.c.h.b16 %v329
        %v390 = vunpack.c.l.b16 %v330
        %v391 = vunpack.c.h.b16 %v330
        %v392 = vunpack.c.l.b16 %v331
        %v393 = vunpack.c.h.b16 %v331
        %v394 = vunpack.c.l.b16 %v332
        %v395 = vunpack.c.h.b16 %v332
        %v396 = vunpack.c.l.b16 %v333
        %v397 = vunpack.c.h.b16 %v333
        %v398 = vunpack.c.l.b16 %v334
        %v399 = vunpack.c.h.b16 %v334
        %v400 = vunpack.c.l.b16 %v335
        %v401 = vunpack.c.h.b16 %v335
        %v402 = vpack.c.b16 %v372, %v370
        %v403 = vpack.c.b16 %v373, %v371
        %v404 = vpack.c.b16 %v376, %v374
        %v405 = vpack.c.b16 %v377, %v375
        %v406 = vpack.c.b16 %v380, %v378
        %v407 = vpack.c.b16 %v381, %v379
        %v408 = vpack.c.b16 %v384, %v382
        %v409 = vpack.c.b16 %v385, %v383
        %v410 = vpack.c.b16 %v388, %v386
        %v411 = vpack.c.b16 %v389, %v387
        %v412 = vpack.c.b16 %v392, %v390
        %v413 = vpack.c.b16 %v393, %v391
        %v414 = vpack.c.b16 %v396, %v394
        %v415 = vpack.c.b16 %v397, %v395
        %v416 = vpack.c.b16 %v400, %v398
        %v417 = vpack.c.b16 %v401, %v399
        %434 = vmatpush.bf16.msra.mxu0 %v416
        %435 = vmatpush.bf16.msra.mxu0 %v414
        %436 = vmatpush.bf16.msra.mxu0 %v412
        %437 = vmatpush.bf16.msra.mxu0 %v410
        %438 = vmatpush.bf16.msra.mxu0 %v408
        %439 = vmatpush.bf16.msra.mxu0 %v406
        %440 = vmatpush.bf16.msra.mxu0 %v404
        %441 = vmatpush.bf16.msra.mxu0 %v402
        %442 = vmatmul.bf16.gmra.mxu0 %v350
        %v443 = vpop.f32.mrf.mxu0
        %v444 = vadd.f32 %v338, %v443
        %v445 = vpop.f32.mrf.mxu0
        %v446 = vadd.f32 %v338, %v445
        %447 = vmatmul.bf16.gmra.mxu0 %v351
        %v448 = vpop.f32.mrf.mxu0
        %v449 = vadd.f32 %v338, %v448
        %v450 = vpop.f32.mrf.mxu0
        %v451 = vadd.f32 %v338, %v450
        %452 = vdwg.mxu0
        %453 = vmatpush.bf16.msra.mxu0 %v417
        %454 = vmatpush.bf16.msra.mxu0 %v415
        %455 = vmatpush.bf16.msra.mxu0 %v413
        %456 = vmatpush.bf16.msra.mxu0 %v411
        %457 = vmatpush.bf16.msra.mxu0 %v409
        %458 = vmatpush.bf16.msra.mxu0 %v407
        %459 = vmatpush.bf16.msra.mxu0 %v405
        %460 = vmatpush.bf16.msra.mxu0 %v403
        %461 = vmatmul.bf16.gmra.mxu0 %v350
        %v462 = vpop.f32.mrf.mxu0
        %v463 = vadd.f32 %v339, %v462
        %v464 = vpop.f32.mrf.mxu0
        %v465 = vadd.f32 %v339, %v464
        %466 = vmatmul.bf16.gmra.mxu0 %v351
        %v467 = vpop.f32.mrf.mxu0
        %v468 = vadd.f32 %v339, %v467
        %v469 = vpop.f32.mrf.mxu0
        %v470 = vadd.f32 %v339, %v469
        %471 = vdwg.mxu0
        %v472 = vmax.f32 %v444, 0.0
        %v473 = vmax.f32 %v463, 0.0
        %v474 = vmax.f32 %v446, 0.0
        %v475 = vmax.f32 %v465, 0.0
        %v476 = vmax.f32 %v449, 0.0
        %v477 = vmax.f32 %v468, 0.0
        %v478 = vmax.f32 %v451, 0.0
        %v479 = vmax.f32 %v470, 0.0
        %v480 = vpack.c.bf16 %v474, %v472
        %v481 = vpack.c.bf16 %v475, %v473
        %v482 = vpack.c.bf16 %v478, %v476
        %v483 = vpack.c.bf16 %v479, %v477
        %v484 = vld [vmem:[#allocation2] sm:$0xff]
        %v485 = vld [vmem:[#allocation2 + $0x8] sm:$0xff]
        %v486 = vld [vmem:[#allocation2 + $0x10] sm:$0xff]
        %v487 = vld [vmem:[#allocation2 + $0x18] sm:$0xff]
        %v488 = vld [vmem:[#allocation2 + $0x20] sm:$0xff]
        %v489 = vld [vmem:[#allocation2 + $0x28] sm:$0xff]
        %v490 = vld [vmem:[#allocation2 + $0x30] sm:$0xff]
        %v491 = vld [vmem:[#allocation2 + $0x38] sm:$0xff]
        %v492 = vld [vmem:[#allocation2 + $0x40] sm:$0xff]
        %v493 = vld [vmem:[#allocation2 + $0x48] sm:$0xff]
        %v494 = vld [vmem:[#allocation2 + $0x50] sm:$0xff]
        %v495 = vld [vmem:[#allocation2 + $0x58] sm:$0xff]
        %v496 = vld [vmem:[#allocation2 + $0x60] sm:$0xff]
        %v497 = vld [vmem:[#allocation2 + $0x68] sm:$0xff]
        %v498 = vld [vmem:[#allocation2 + $0x70] sm:$0xff]
        %v499 = vld [vmem:[#allocation2 + $0x78] sm:$0xff]
        %v500 = vld [vmem:[#allocation2 + $0x80] sm:$0xff]
        %v501 = vld [vmem:[#allocation2 + $0x88] sm:$0xff]
        %v502 = vld [vmem:[#allocation2 + $0x90] sm:$0xff]
        %v503 = vld [vmem:[#allocation2 + $0x98] sm:$0xff]
        %v504 = vld [vmem:[#allocation2 + $0xa0] sm:$0xff]
        %v505 = vld [vmem:[#allocation2 + $0xa8] sm:$0xff]
        %v506 = vld [vmem:[#allocation2 + $0xb0] sm:$0xff]
        %v507 = vld [vmem:[#allocation2 + $0xb8] sm:$0xff]
        %v508 = vld [vmem:[#allocation2 + $0xc0] sm:$0xff]
        %v509 = vld [vmem:[#allocation2 + $0xc8] sm:$0xff]
        %v510 = vld [vmem:[#allocation2 + $0xd0] sm:$0xff]
        %v511 = vld [vmem:[#allocation2 + $0xd8] sm:$0xff]
        %v512 = vld [vmem:[#allocation2 + $0xe0] sm:$0xff]
        %v513 = vld [vmem:[#allocation2 + $0xe8] sm:$0xff]
        %v514 = vld [vmem:[#allocation2 + $0xf0] sm:$0xff]
        %v515 = vld [vmem:[#allocation2 + $0xf8] sm:$0xff]
        %v516 = vld [vmem:[%s4] sm:$0x3]
        %v518 = vperm.slane %v516, 0
        %v519 = vperm.slane %v516, 1
        %v554 = vunpack.c.l.b16 %v484
        %v555 = vunpack.c.h.b16 %v484
        %v556 = vunpack.c.l.b16 %v485
        %v557 = vunpack.c.h.b16 %v485
        %v558 = vunpack.c.l.b16 %v486
        %v559 = vunpack.c.h.b16 %v486
        %v560 = vunpack.c.l.b16 %v487
        %v561 = vunpack.c.h.b16 %v487
        %v562 = vunpack.c.l.b16 %v488
        %v563 = vunpack.c.h.b16 %v488
        %v564 = vunpack.c.l.b16 %v489
        %v565 = vunpack.c.h.b16 %v489
        %v566 = vunpack.c.l.b16 %v490
        %v567 = vunpack.c.h.b16 %v490
        %v568 = vunpack.c.l.b16 %v491
        %v569 = vunpack.c.h.b16 %v491
        %v570 = vunpack.c.l.b16 %v492
        %v571 = vunpack.c.h.b16 %v492
        %v572 = vunpack.c.l.b16 %v493
        %v573 = vunpack.c.h.b16 %v493
        %v574 = vunpack.c.l.b16 %v494
        %v575 = vunpack.c.h.b16 %v494
        %v576 = vunpack.c.l.b16 %v495
        %v577 = vunpack.c.h.b16 %v495
        %v578 = vunpack.c.l.b16 %v496
        %v579 = vunpack.c.h.b16 %v496
        %v580 = vunpack.c.l.b16 %v497
        %v581 = vunpack.c.h.b16 %v497
        %v582 = vunpack.c.l.b16 %v498
        %v583 = vunpack.c.h.b16 %v498
        %v584 = vunpack.c.l.b16 %v499
        %v585 = vunpack.c.h.b16 %v499
        %v586 = vunpack.c.l.b16 %v500
        %v587 = vunpack.c.h.b16 %v500
        %v588 = vunpack.c.l.b16 %v501
        %v589 = vunpack.c.h.b16 %v501
        %v590 = vunpack.c.l.b16 %v502
        %v591 = vunpack.c.h.b16 %v502
        %v592 = vunpack.c.l.b16 %v503
        %v593 = vunpack.c.h.b16 %v503
        %v594 = vunpack.c.l.b16 %v504
        %v595 = vunpack.c.h.b16 %v504
        %v596 = vunpack.c.l.b16 %v505
        %v597 = vunpack.c.h.b16 %v505
        %v598 = vunpack.c.l.b16 %v506
        %v599 = vunpack.c.h.b16 %v506
        %v600 = vunpack.c.l.b16 %v507
        %v601 = vunpack.c.h.b16 %v507
        %v602 = vunpack.c.l.b16 %v508
        %v603 = vunpack.c.h.b16 %v508
        %v604 = vunpack.c.l.b16 %v509
        %v605 = vunpack.c.h.b16 %v509
        %v606 = vunpack.c.l.b16 %v510
        %v607 = vunpack.c.h.b16 %v510
        %v608 = vunpack.c.l.b16 %v511
        %v609 = vunpack.c.h.b16 %v511
        %v610 = vunpack.c.l.b16 %v512
        %v611 = vunpack.c.h.b16 %v512
        %v612 = vunpack.c.l.b16 %v513
        %v613 = vunpack.c.h.b16 %v513
        %v614 = vunpack.c.l.b16 %v514
        %v615 = vunpack.c.h.b16 %v514
        %v616 = vunpack.c.l.b16 %v515
        %v617 = vunpack.c.h.b16 %v515
        %v618 = vpack.c.b16 %v556, %v554
        %v619 = vpack.c.b16 %v557, %v555
        %v620 = vpack.c.b16 %v560, %v558
        %v621 = vpack.c.b16 %v561, %v559
        %v622 = vpack.c.b16 %v564, %v562
        %v623 = vpack.c.b16 %v565, %v563
        %v624 = vpack.c.b16 %v568, %v566
        %v625 = vpack.c.b16 %v569, %v567
        %v626 = vpack.c.b16 %v572, %v570
        %v627 = vpack.c.b16 %v573, %v571
        %v628 = vpack.c.b16 %v576, %v574
        %v629 = vpack.c.b16 %v577, %v575
        %v630 = vpack.c.b16 %v580, %v578
        %v631 = vpack.c.b16 %v581, %v579
        %v632 = vpack.c.b16 %v584, %v582
        %v633 = vpack.c.b16 %v585, %v583
        %v634 = vpack.c.b16 %v588, %v586
        %v635 = vpack.c.b16 %v589, %v587
        %v636 = vpack.c.b16 %v592, %v590
        %v637 = vpack.c.b16 %v593, %v591
        %v638 = vpack.c.b16 %v596, %v594
        %v639 = vpack.c.b16 %v597, %v595
        %v640 = vpack.c.b16 %v600, %v598
        %v641 = vpack.c.b16 %v601, %v599
        %v642 = vpack.c.b16 %v604, %v602
        %v643 = vpack.c.b16 %v605, %v603
        %v644 = vpack.c.b16 %v608, %v606
        %v645 = vpack.c.b16 %v609, %v607
        %v646 = vpack.c.b16 %v612, %v610
        %v647 = vpack.c.b16 %v613, %v611
        %v648 = vpack.c.b16 %v616, %v614
        %v649 = vpack.c.b16 %v617, %v615
        %682 = vmatpush.bf16.msra.mxu0 %v632
        %683 = vmatpush.bf16.msra.mxu0 %v630
        %684 = vmatpush.bf16.msra.mxu0 %v628
        %685 = vmatpush.bf16.msra.mxu0 %v626
        %686 = vmatpush.bf16.msra.mxu0 %v624
        %687 = vmatpush.bf16.msra.mxu0 %v622
        %688 = vmatpush.bf16.msra.mxu0 %v620
        %689 = vmatpush.bf16.msra.mxu0 %v618
        %690 = vmatmul.bf16.gmra.mxu0 %v480
        %v691 = vpop.f32.mrf.mxu0
        %v692 = vadd.f32 %v518, %v691
        %v693 = vpop.f32.mrf.mxu0
        %v694 = vadd.f32 %v518, %v693
        %695 = vmatmul.bf16.gmra.mxu0 %v482
        %v696 = vpop.f32.mrf.mxu0
        %v697 = vadd.f32 %v518, %v696
        %v698 = vpop.f32.mrf.mxu0
        %v699 = vadd.f32 %v518, %v698
        %700 = vdwg.mxu0
        %701 = vmatpush.bf16.msra.mxu0 %v648
        %702 = vmatpush.bf16.msra.mxu0 %v646
        %703 = vmatpush.bf16.msra.mxu0 %v644
        %704 = vmatpush.bf16.msra.mxu0 %v642
        %705 = vmatpush.bf16.msra.mxu0 %v640
        %706 = vmatpush.bf16.msra.mxu0 %v638
        %707 = vmatpush.bf16.msra.mxu0 %v636
        %708 = vmatpush.bf16.msra.mxu0 %v634
        %709 = vmatmul.bf16.gmra.mxu0 %v481
        %v710 = vpop.f32.mrf.mxu0
        %v711 = vadd.f32 %v692, %v710
        %v712 = vpop.f32.mrf.mxu0
        %v713 = vadd.f32 %v694, %v712
        %714 = vmatmul.bf16.gmra.mxu0 %v483
        %v715 = vpop.f32.mrf.mxu0
        %v716 = vadd.f32 %v697, %v715
        %v717 = vpop.f32.mrf.mxu0
        %v718 = vadd.f32 %v699, %v717
        %719 = vdwg.mxu0
        %720 = vmatpush.bf16.msra.mxu0 %v633
        %721 = vmatpush.bf16.msra.mxu0 %v631
        %722 = vmatpush.bf16.msra.mxu0 %v629
        %723 = vmatpush.bf16.msra.mxu0 %v627
        %724 = vmatpush.bf16.msra.mxu0 %v625
        %725 = vmatpush.bf16.msra.mxu0 %v623
        %726 = vmatpush.bf16.msra.mxu0 %v621
        %727 = vmatpush.bf16.msra.mxu0 %v619
        %728 = vmatmul.bf16.gmra.mxu0 %v480
        %v729 = vpop.f32.mrf.mxu0
        %v730 = vadd.f32 %v519, %v729
        %v731 = vpop.f32.mrf.mxu0
        %v732 = vadd.f32 %v519, %v731
        %733 = vmatmul.bf16.gmra.mxu0 %v482
        %v734 = vpop.f32.mrf.mxu0
        %v735 = vadd.f32 %v519, %v734
        %v736 = vpop.f32.mrf.mxu0
        %v737 = vadd.f32 %v519, %v736
        %738 = vdwg.mxu0
        %739 = vmatpush.bf16.msra.mxu0 %v649
        %740 = vmatpush.bf16.msra.mxu0 %v647
        %741 = vmatpush.bf16.msra.mxu0 %v645
        %742 = vmatpush.bf16.msra.mxu0 %v643
        %743 = vmatpush.bf16.msra.mxu0 %v641
        %744 = vmatpush.bf16.msra.mxu0 %v639
        %745 = vmatpush.bf16.msra.mxu0 %v637
        %746 = vmatpush.bf16.msra.mxu0 %v635
        %747 = vmatmul.bf16.gmra.mxu0 %v481
        %v748 = vpop.f32.mrf.mxu0
        %v749 = vadd.f32 %v730, %v748
        %v750 = vpop.f32.mrf.mxu0
        %v751 = vadd.f32 %v732, %v750
        %752 = vmatmul.bf16.gmra.mxu0 %v483
        %v753 = vpop.f32.mrf.mxu0
        %v754 = vadd.f32 %v735, %v753
        %v755 = vpop.f32.mrf.mxu0
        %v756 = vadd.f32 %v737, %v755
        %757 = vdwg.mxu0
        %v758 = vmax.f32 %v711, 0.0
        %v759 = vmax.f32 %v749, 0.0
        %v760 = vmax.f32 %v713, 0.0
        %v761 = vmax.f32 %v751, 0.0
        %v762 = vmax.f32 %v716, 0.0
        %v763 = vmax.f32 %v754, 0.0
        %v764 = vmax.f32 %v718, 0.0
        %v765 = vmax.f32 %v756, 0.0
        %v766 = vpack.c.bf16 %v760, %v758
        %v767 = vpack.c.bf16 %v761, %v759
        %v768 = vpack.c.bf16 %v764, %v762
        %v769 = vpack.c.bf16 %v765, %v763
        %v770 = vld [vmem:[#allocation4] sm:$0xf]
        %v771 = vld [vmem:[#allocation4 + $0x4] sm:$0xf]
        %v772 = vld [vmem:[#allocation4 + $0x8] sm:$0xf]
        %v773 = vld [vmem:[#allocation4 + $0xc] sm:$0xf]
        %v774 = vld [vmem:[#allocation4 + $0x10] sm:$0xf]
        %v775 = vld [vmem:[#allocation4 + $0x14] sm:$0xf]
        %v776 = vld [vmem:[#allocation4 + $0x18] sm:$0xf]
        %v777 = vld [vmem:[#allocation4 + $0x1c] sm:$0xf]
        %v778 = vld [vmem:[#allocation4 + $0x20] sm:$0xf]
        %v779 = vld [vmem:[#allocation4 + $0x24] sm:$0xf]
        %v780 = vld [vmem:[#allocation4 + $0x28] sm:$0xf]
        %v781 = vld [vmem:[#allocation4 + $0x2c] sm:$0xf]
        %v782 = vld [vmem:[#allocation4 + $0x30] sm:$0xf]
        %v783 = vld [vmem:[#allocation4 + $0x34] sm:$0xf]
        %v784 = vld [vmem:[#allocation4 + $0x38] sm:$0xf]
        %v785 = vld [vmem:[#allocation4 + $0x3c] sm:$0xf]
        %v786 = vld [vmem:[#allocation4 + $0x40] sm:$0xf]
        %v787 = vld [vmem:[#allocation4 + $0x44] sm:$0xf]
        %v788 = vld [vmem:[#allocation4 + $0x48] sm:$0xf]
        %v789 = vld [vmem:[#allocation4 + $0x4c] sm:$0xf]
        %v790 = vld [vmem:[#allocation4 + $0x50] sm:$0xf]
        %v791 = vld [vmem:[#allocation4 + $0x54] sm:$0xf]
        %v792 = vld [vmem:[#allocation4 + $0x58] sm:$0xf]
        %v793 = vld [vmem:[#allocation4 + $0x5c] sm:$0xf]
        %v794 = vld [vmem:[#allocation4 + $0x60] sm:$0xf]
        %v795 = vld [vmem:[#allocation4 + $0x64] sm:$0xf]
        %v796 = vld [vmem:[#allocation4 + $0x68] sm:$0xf]
        %v797 = vld [vmem:[#allocation4 + $0x6c] sm:$0xf]
        %v798 = vld [vmem:[#allocation4 + $0x70] sm:$0xf]
        %v799 = vld [vmem:[#allocation4 + $0x74] sm:$0xf]
        %v800 = vld [vmem:[#allocation4 + $0x78] sm:$0xf]
        %v801 = vld [vmem:[#allocation4 + $0x7c] sm:$0xf]
        %v802 = vld [vmem:[%s6] sm:$0x1]
        %v804 = vperm.slane %v802, 0
        %v838 = vunpack.c.l.b16 %v770
        %v839 = vunpack.c.l.b16 %v771
        %v840 = vunpack.c.l.b16 %v772
        %v841 = vunpack.c.l.b16 %v773
        %v842 = vunpack.c.l.b16 %v774
        %v843 = vunpack.c.l.b16 %v775
        %v844 = vunpack.c.l.b16 %v776
        %v845 = vunpack.c.l.b16 %v777
        %v846 = vunpack.c.l.b16 %v778
        %v847 = vunpack.c.l.b16 %v779
        %v848 = vunpack.c.l.b16 %v780
        %v849 = vunpack.c.l.b16 %v781
        %v850 = vunpack.c.l.b16 %v782
        %v851 = vunpack.c.l.b16 %v783
        %v852 = vunpack.c.l.b16 %v784
        %v853 = vunpack.c.l.b16 %v785
        %v854 = vunpack.c.l.b16 %v786
        %v855 = vunpack.c.l.b16 %v787
        %v856 = vunpack.c.l.b16 %v788
        %v857 = vunpack.c.l.b16 %v789
        %v858 = vunpack.c.l.b16 %v790
        %v859 = vunpack.c.l.b16 %v791
        %v860 = vunpack.c.l.b16 %v792
        %v861 = vunpack.c.l.b16 %v793
        %v862 = vunpack.c.l.b16 %v794
        %v863 = vunpack.c.l.b16 %v795
        %v864 = vunpack.c.l.b16 %v796
        %v865 = vunpack.c.l.b16 %v797
        %v866 = vunpack.c.l.b16 %v798
        %v867 = vunpack.c.l.b16 %v799
        %v868 = vunpack.c.l.b16 %v800
        %v869 = vunpack.c.l.b16 %v801
        %v870 = vpack.c.b16 %v839, %v838
        %v871 = vpack.c.b16 %v841, %v840
        %v872 = vpack.c.b16 %v843, %v842
        %v873 = vpack.c.b16 %v845, %v844
        %v874 = vpack.c.b16 %v847, %v846
        %v875 = vpack.c.b16 %v849, %v848
        %v876 = vpack.c.b16 %v851, %v850
        %v877 = vpack.c.b16 %v853, %v852
        %v878 = vpack.c.b16 %v855, %v854
        %v879 = vpack.c.b16 %v857, %v856
        %v880 = vpack.c.b16 %v859, %v858
        %v881 = vpack.c.b16 %v861, %v860
        %v882 = vpack.c.b16 %v863, %v862
        %v883 = vpack.c.b16 %v865, %v864
        %v884 = vpack.c.b16 %v867, %v866
        %v885 = vpack.c.b16 %v869, %v868
        %902 = vmatpush.bf16.msra.mxu0 %v877
        %903 = vmatpush.bf16.msra.mxu0 %v876
        %904 = vmatpush.bf16.msra.mxu0 %v875
        %905 = vmatpush.bf16.msra.mxu0 %v874
        %906 = vmatpush.bf16.msra.mxu0 %v873
        %907 = vmatpush.bf16.msra.mxu0 %v872
        %908 = vmatpush.bf16.msra.mxu0 %v871
        %909 = vmatpush.bf16.msra.mxu0 %v870
        %910 = vmatmul.bf16.gmra.mxu0 %v766
        %v911 = vpop.f32.mrf.mxu0
        %v912 = vadd.f32 %v804, %v911
        %v913 = vpop.f32.mrf.mxu0
        %v914 = vadd.f32 %v804, %v913
        %915 = vmatmul.bf16.gmra.mxu0 %v768
        %v916 = vpop.f32.mrf.mxu0
        %v917 = vadd.f32 %v804, %v916
        %v918 = vpop.f32.mrf.mxu0
        %v919 = vadd.f32 %v804, %v918
        %920 = vdwg.mxu0
        %921 = vmatpush.bf16.msra.mxu0 %v885
        %922 = vmatpush.bf16.msra.mxu0 %v884
        %923 = vmatpush.bf16.msra.mxu0 %v883
        %924 = vmatpush.bf16.msra.mxu0 %v882
        %925 = vmatpush.bf16.msra.mxu0 %v881
        %926 = vmatpush.bf16.msra.mxu0 %v880
        %927 = vmatpush.bf16.msra.mxu0 %v879
        %928 = vmatpush.bf16.msra.mxu0 %v878
        %929 = vmatmul.bf16.gmra.mxu0 %v767
        %v930 = vpop.f32.mrf.mxu0
        %v931 = vadd.f32 %v912, %v930
        %v932 = vpop.f32.mrf.mxu0
        %v933 = vadd.f32 %v914, %v932
        %934 = vmatmul.bf16.gmra.mxu0 %v769
        %v935 = vpop.f32.mrf.mxu0
        %v936 = vadd.f32 %v917, %v935
        %v937 = vpop.f32.mrf.mxu0
        %v938 = vadd.f32 %v919, %v937
        %939 = vdwg.mxu0
        %940 = vst [vmem:[%s314] sm:$0xff] %v931
        %941 = vst [vmem:[%s314 + $0x8] sm:$0xff] %v933
        %942 = vst [vmem:[%s314 + $0x10] sm:$0xff] %v936
        %943 = vst [vmem:[%s314 + $0x18] sm:$0xff] %v938
        %s944 = smul.u32 4, %s20
        %p945 = scmp.lt.s32.totalorder %s944, 7
        %s946 = scalar_select %p945, %s944, 7
        %s947 = smul.addr %s946, 8
        %s948 = scalar_lea.vmem %s7, %s947
        // Predicated region
        $region57: #{_mlp_pallas.1} parent=47 // pred_check
          %p949 = pneg %p190
        $region58: #{_mlp_pallas.1} parent=47 // pred_check_branch
          %951 = sbr.rel (%p949) target = $region60
        $region59: #{_mlp_pallas.1} parent=47 // pred_region
          %s952 = smul.u32 4, %s20
        $region60: #{_mlp_pallas.1} parent=47 // pred_fallthru
          _
      $region48: #{_mlp_pallas.1} parent=5 // pred_fallthru
        _
      %p953 = scmp.le.s32.totalorder 2, %s15
      // Predicated region
      $region61: #{_mlp_pallas.1} parent=5 // pred_check
        %p954 = pneg %p953
      $region62: #{_mlp_pallas.1} parent=5 // pred_check_branch
        %956 = sbr.rel (%p954) target = $region64
      $region63: #{_mlp_pallas.1} parent=5 // pred_region
        %s957 = ssub.s32 %s15, 2
        // Predicated region
        $region65: #{_mlp_pallas.1} parent=63 // pred_check
          %p958 = pneg %p196
        $region66: #{_mlp_pallas.1} parent=63 // pred_check_branch
          %960 = sbr.rel (%p958) target = $region68
        $region67: #{_mlp_pallas.1} parent=63 // pred_region
          %s961 = smul.u32 4, %s21
          %p962 = scmp.lt.s32.totalorder %s961, 7
          %s963 = scalar_select %p962, %s961, 7
          %s964 = smul.addr %s963, 8
          %s965 = scalar_lea.vmem %s7, %s964
        $region68: #{_mlp_pallas.1} parent=63 // pred_fallthru
          _
      $region64: #{_mlp_pallas.1} parent=5 // pred_fallthru
        _
    $region6: #{_mlp_pallas.1} parent=1 // loop_footer
      %s19 = sadd.s32 1, %s15
    $region7: #{_mlp_pallas.1} parent=1 // loop_footer_branch
      %14 = sbr.rel target = $region3
    $region8: #{_mlp_pallas.1} parent=1 // loop_exit
      _
    %966 = vsyncpa [#allocation3], 1
    %s967 = scalar_lea.sflag [#allocation3], 1
    %968 = vsyncpa %s967, 1
    %969 = vsyncpa [#allocation5], 1

</llo_original>
